<compile_context>
chip_gen: v7x
topology: tpu7x:2x2x1
jax: 0.10.0
libtpu: 0.0.40
codegen_flags: <defaults>
</compile_context>

<pallas_src>
import jax
import jax.numpy as jnp
from jax import lax
from jax.experimental import pallas as pl
from jax.experimental.pallas import tpu as pltpu

_LARGE = 1e30  # finite sentinel for "not a valid candidate"


def _soft_margin_triplet_kernel(xa_ref, xt_ref, sq_col_ref, sq_row_ref,
                                lab_col_ref, lab_row_ref, out_ref,
                                hp2_ref, hn2_ref):
    j = pl.program_id(1)

    @pl.when(j == 0)
    def _():
        hp2_ref[...] = jnp.zeros(hp2_ref.shape, jnp.float32)
        hn2_ref[...] = jnp.full(hn2_ref.shape, _LARGE, jnp.float32)

    # (TM, TN) Gram tile on the MXU: plain NN contraction, f32 accumulation.
    dot = lax.dot_general(
        xa_ref[...], xt_ref[...],
        dimension_numbers=(((1,), (0,)), ((), ())),
        preferred_element_type=jnp.float32)                      # (TM, TN)

    # squared pairwise euclidean distances for this tile
    dist2 = jnp.maximum(sq_row_ref[...] - 2.0 * dot + sq_col_ref[...], 0.0)

    same = lab_col_ref[...] == lab_row_ref[...]                  # (TM, TN) bool

    # Reductions in squared-distance space (sqrt is monotone, so argmax/argmin
    # are unchanged).  Diagonal has dist2 ~ 0, so it never wins the positive
    # max; padded columns have dist2 ~ LARGE, so they never win the negative
    # min and (via the sentinel label) never count as positives.
    hp2_ref[...] = jnp.maximum(
        hp2_ref[...],
        jnp.max(jnp.where(same, dist2, 0.0), axis=1, keepdims=True))
    hn2_ref[...] = jnp.minimum(
        hn2_ref[...],
        jnp.min(jnp.where(same, _LARGE, dist2), axis=1, keepdims=True))

    @pl.when(j == pl.num_programs(1) - 1)
    def _():
        z = jnp.sqrt(hp2_ref[...]) - jnp.sqrt(hn2_ref[...])
        # numerically stable softplus(z) = log(1 + exp(z))
        out_ref[...] = jnp.maximum(z, 0.0) + jnp.log1p(jnp.exp(-jnp.abs(z)))


def _round_up(x, m):
    return (x + m - 1) // m * m


def _divisor_tile(total, preferred, unit):
    """Largest multiple of `unit` that divides `total` and is <= preferred."""
    t = min(preferred, total)
    t = max(unit, (t // unit) * unit)
    while total % t:
        t -= unit
    return t


def _pick_tiling(B, block_m, block_n):
    """Return (b_pad, tm, tn) with tm | b_pad and tn | b_pad."""
    if B <= 128:
        b_pad = _round_up(max(B, 1), 8)
        return b_pad, b_pad, b_pad        # single tile; block dims == full dims
    b_pad = _round_up(B, 128)
    tn = _divisor_tile(b_pad, block_n, 128)
    # prefer >= 2 anchor tiles so v7x's two TensorCores both get work
    tm = _divisor_tile(b_pad, min(block_m, max(128, b_pad // 2)), 128)
    return b_pad, tm, tn


def batch_hard_soft_margin_triplet_loss(embeddings, labels, *,
                                        block_m=256, block_n=512):
    """embeddings: (B, D) float array, labels: (B,) int array -> scalar f32 loss."""
    B, D = embeddings.shape
    labels = labels.astype(jnp.int32)

    b_pad, tm, tn = _pick_tiling(B, block_m, block_n)
    pad = b_pad - B
    if pad:
        # Sentinel label can never equal a real label (wraps only at INT32_MIN).
        sentinel = jnp.min(labels) - 1
        embeddings = jnp.pad(embeddings, ((0, pad), (0, 0)))
        labels = jnp.concatenate(
            [labels, jnp.broadcast_to(sentinel, (pad,)).astype(jnp.int32)])

    emb_f32 = embeddings.astype(jnp.float32)
    sq = jnp.sum(emb_f32 * emb_f32, axis=1)                      # (Bp,) f32
    col_valid = jnp.arange(b_pad, dtype=jnp.int32) < B
    # Padded columns are pushed out of the negative min via a LARGE sq-norm.
    sq_row = jnp.where(col_valid, sq, _LARGE).reshape(1, b_pad)
    sq_col = sq.reshape(b_pad, 1)
    lab_col = labels.reshape(b_pad, 1)
    lab_row = labels.reshape(1, b_pad)
    emb_t = embeddings.T                                         # (D, Bp), paid once by XLA

    grid = (b_pad // tm, b_pad // tn)

    grid_spec = pltpu.PrefetchScalarGridSpec(
        num_scalar_prefetch=0,
        grid=grid,
        in_specs=[
            pl.BlockSpec((tm, D), lambda i, j: (i, 0)),   # anchor embeddings (blocked)
            pl.BlockSpec((D, tn), lambda i, j: (0, j)),   # embeddings^T column block
            pl.BlockSpec((tm, 1), lambda i, j: (i, 0)),   # sq norms, anchor column
            pl.BlockSpec((1, tn), lambda i, j: (0, j)),   # sq norms, column row (pad=LARGE)
            pl.BlockSpec((tm, 1), lambda i, j: (i, 0)),   # labels, anchor column
            pl.BlockSpec((1, tn), lambda i, j: (0, j)),   # labels, column row (pad=sentinel)
        ],
        out_specs=pl.BlockSpec((tm, 1), lambda i, j: (i, 0)),
        scratch_shapes=[pltpu.VMEM((tm, 1), jnp.float32),   # running hardest-pos^2
                        pltpu.VMEM((tm, 1), jnp.float32)],  # running hardest-neg^2
    )

    per_anchor = pl.pallas_call(
        _soft_margin_triplet_kernel,
        out_shape=jax.ShapeDtypeStruct((b_pad, 1), jnp.float32),
        grid_spec=grid_spec,
        compiler_params=pltpu.CompilerParams(
            dimension_semantics=("parallel", "arbitrary"),
            vmem_limit_bytes=48 * 1024 * 1024),
    )(embeddings, emb_t, sq_col, sq_row, lab_col, lab_row)

    return jnp.mean(per_anchor[:B, 0])


def _reference_loss(embeddings, labels):
    # Plain-JAX reference mirroring the PyTorch module, for a correctness check.
    x = embeddings.astype(jnp.float32)
    dot = x @ x.T
    sq = jnp.diag(dot)
    dist2 = sq[None, :] - 2.0 * dot + sq[:, None]
    dist2 = jnp.maximum(dist2, 0.0)
    zero_mask = (dist2 == 0.0).astype(jnp.float32)
    dist = (1.0 - zero_mask) * jnp.sqrt(dist2 + zero_mask * 1e-16)
    eye = jnp.eye(x.shape[0], dtype=bool)
    labels_equal = labels[None, :] == labels[:, None]
    mask_ap = (labels_equal & ~eye).astype(jnp.float32)
    mask_an = (~labels_equal).astype(jnp.float32)
    hp = jnp.max(mask_ap * dist, axis=1, keepdims=True)
    mx = jnp.max(dist, axis=1, keepdims=True)
    hn = jnp.min(dist + mx * (1.0 - mask_an), axis=1, keepdims=True)
    return jnp.mean(jnp.log1p(jnp.exp(hp - hn)))


if __name__ == "__main__":
    key = jax.random.PRNGKey(0)

    # Small check: single-tile path (B=8, D=32), >=2 examples per label class.
    B, D = 8, 32
    embeddings = jax.random.normal(key, (B, D), dtype=jnp.float32)
    labels = jnp.array([0, 0, 1, 1, 2, 2, 3, 3], dtype=jnp.int32)
    loss = jax.block_until_ready(batch_hard_soft_margin_triplet_loss(embeddings, labels))
    ref = _reference_loss(embeddings, labels)
    assert jnp.allclose(loss, ref, rtol=1e-4, atol=1e-5), (loss, ref)

    # Larger check: exercises the 2-D tiled grid (2 anchor tiles x 2 column
    # tiles), batch padding with sentinel labels, and the running accumulators.
    k1, _ = jax.random.split(key)
    B2, D2 = 160, 64
    emb2 = jax.random.normal(k1, (B2, D2), dtype=jnp.float32)
    labels2 = jnp.arange(B2, dtype=jnp.int32) % 20      # 20 classes, 8 each
    loss2 = jax.block_until_ready(
        batch_hard_soft_margin_triplet_loss(emb2, labels2, block_m=128, block_n=128))
    ref2 = _reference_loss(emb2, labels2)
    assert jnp.allclose(loss2, ref2, rtol=1e-4, atol=1e-5), (loss2, ref2)

    print("KERNEL_OK")
</pallas_src>

<mosaic_0001>
module attributes {stable_mosaic.version = 11 : i64} {
  func.func @_soft_margin_triplet_kernel(%arg0: i32, %arg1: i32, %arg2: memref<8x32xf32, #tpu.memory_space<vmem>>, %arg3: memref<32x8xf32, #tpu.memory_space<vmem>>, %arg4: memref<8x1xf32, #tpu.memory_space<vmem>>, %arg5: memref<1x8xf32, #tpu.memory_space<vmem>>, %arg6: memref<8x1xi32, #tpu.memory_space<vmem>>, %arg7: memref<1x8xi32, #tpu.memory_space<vmem>>, %arg8: memref<8x1xf32, #tpu.memory_space<vmem>>, %arg9: memref<8x1xf32, #tpu.memory_space<vmem>>, %arg10: memref<8x1xf32, #tpu.memory_space<vmem>>) attributes {dimension_semantics = [#tpu.dimension_semantics<parallel>, #tpu.dimension_semantics<arbitrary>], iteration_bounds = array<i64: 1, 1>, scalar_prefetch = 0 : i64, scratch_operands = 2 : i64, tpu.core_type = #tpu.core_type<tc>, window_params = [{transform_indices = @transform_0, window_bounds = array<i64: 8, 32>}, {transform_indices = @transform_1, window_bounds = array<i64: 32, 8>}, {transform_indices = @transform_2, window_bounds = array<i64: 8, 1>}, {transform_indices = @transform_3, window_bounds = array<i64: 1, 8>}, {transform_indices = @transform_4, window_bounds = array<i64: 8, 1>}, {transform_indices = @transform_5, window_bounds = array<i64: 1, 8>}, {transform_indices = @transform_6, window_bounds = array<i64: 8, 1>}]} {
    %c0_i32 = arith.constant 0 : i32
    %0 = arith.cmpi eq, %arg1, %c0_i32 : i32
    %1 = arith.extui %0 : i1 to i32
    %c0_i32_0 = arith.constant 0 : i32
    %2 = arith.cmpi ne, %1, %c0_i32_0 : i32
    scf.if %2 {
      %cst_28 = arith.constant 0.000000e+00 : f32
      %38 = vector.broadcast %cst_28 : f32 to vector<8x1xf32>
      %c0_29 = arith.constant 0 : index
      %c0_30 = arith.constant 0 : index
      %39 = vector.load %arg9[%c0_29, %c0_30] : memref<8x1xf32, #tpu.memory_space<vmem>>, vector<8x1xf32>
      tpu.vector_store %arg9[%c0_29, %c0_30], %38 {strides = array<i32>} : memref<8x1xf32, #tpu.memory_space<vmem>>, vector<8x1xf32>,
      %cst_31 = arith.constant 1.000000e+30 : f32
      %40 = vector.broadcast %cst_31 : f32 to vector<8x1xf32>
      %c0_32 = arith.constant 0 : index
      %c0_33 = arith.constant 0 : index
      %41 = vector.load %arg10[%c0_32, %c0_33] : memref<8x1xf32, #tpu.memory_space<vmem>>, vector<8x1xf32>
      tpu.vector_store %arg10[%c0_32, %c0_33], %40 {strides = array<i32>} : memref<8x1xf32, #tpu.memory_space<vmem>>, vector<8x1xf32>,
    } else {
    }
    %c0 = arith.constant 0 : index
    %c0_1 = arith.constant 0 : index
    %3 = vector.load %arg2[%c0, %c0_1] : memref<8x32xf32, #tpu.memory_space<vmem>>, vector<8x32xf32>
    %c0_2 = arith.constant 0 : index
    %c0_3 = arith.constant 0 : index
    %4 = vector.load %arg3[%c0_2, %c0_3] : memref<32x8xf32, #tpu.memory_space<vmem>>, vector<32x8xf32>
    %cst = arith.constant dense<0.000000e+00> : vector<8x8xf32>
    %5 = tpu.matmul %3, %4, %cst {dimension_numbers = #tpu.dot_dimension_numbers<[1], [0], [0], [1], [0, 0, 1, 1], [], []>} : vector<8x32xf32>, vector<32x8xf32>, vector<8x8xf32> -> vector<8x8xf32>
    %c0_4 = arith.constant 0 : index
    %c0_5 = arith.constant 0 : index
    %6 = vector.load %arg5[%c0_4, %c0_5] : memref<1x8xf32, #tpu.memory_space<vmem>>, vector<1x8xf32>
    %cst_6 = arith.constant 2.000000e+00 : f32
    %7 = vector.broadcast %cst_6 : f32 to vector<8x8xf32>
    %8 = arith.mulf %7, %5 : vector<8x8xf32>
    %9 = vector.broadcast %6 : vector<1x8xf32> to vector<8x8xf32>
    %10 = arith.subf %9, %8 : vector<8x8xf32>
    %c0_7 = arith.constant 0 : index
    %c0_8 = arith.constant 0 : index
    %11 = vector.load %arg4[%c0_7, %c0_8] : memref<8x1xf32, #tpu.memory_space<vmem>>, vector<8x1xf32>
    %12 = vector.broadcast %11 : vector<8x1xf32> to vector<8x8xf32>
    %13 = arith.addf %10, %12 : vector<8x8xf32>
    %cst_9 = arith.constant 0.000000e+00 : f32
    %14 = vector.broadcast %cst_9 : f32 to vector<8x8xf32>
    %15 = arith.maximumf %13, %14 : vector<8x8xf32>
    %c0_10 = arith.constant 0 : index
    %c0_11 = arith.constant 0 : index
    %16 = vector.load %arg6[%c0_10, %c0_11] : memref<8x1xi32, #tpu.memory_space<vmem>>, vector<8x1xi32>
    %c0_12 = arith.constant 0 : index
    %c0_13 = arith.constant 0 : index
    %17 = vector.load %arg7[%c0_12, %c0_13] : memref<1x8xi32, #tpu.memory_space<vmem>>, vector<1x8xi32>
    %18 = vector.broadcast %16 : vector<8x1xi32> to vector<8x8xi32>
    %19 = vector.broadcast %17 : vector<1x8xi32> to vector<8x8xi32>
    %20 = arith.cmpi eq, %18, %19 : vector<8x8xi32>
    %c0_14 = arith.constant 0 : index
    %c0_15 = arith.constant 0 : index
    %21 = vector.load %arg9[%c0_14, %c0_15] : memref<8x1xf32, #tpu.memory_space<vmem>>, vector<8x1xf32>
    %cst_16 = arith.constant 0.000000e+00 : f32
    %22 = vector.broadcast %cst_16 : f32 to vector<8x8xf32>
    %23 = arith.select %20, %15, %22 : vector<8x8xi1>, vector<8x8xf32>
    %cst_17 = arith.constant dense<0xFF800000> : vector<8xf32>
    %24 = vector.multi_reduction <maximumf>, %23, %cst_17 [1] : vector<8x8xf32> to vector<8xf32>
    %25 = vector.shape_cast %24 : vector<8xf32> to vector<8x1xf32>
    %26 = arith.maximumf %21, %25 : vector<8x1xf32>
    %c0_18 = arith.constant 0 : index
    %c0_19 = arith.constant 0 : index
    %27 = vector.load %arg9[%c0_18, %c0_19] : memref<8x1xf32, #tpu.memory_space<vmem>>, vector<8x1xf32>
    tpu.vector_store %arg9[%c0_18, %c0_19], %26 {strides = array<i32>} : memref<8x1xf32, #tpu.memory_space<vmem>>, vector<8x1xf32>,
    %c0_20 = arith.constant 0 : index
    %c0_21 = arith.constant 0 : index
    %28 = vector.load %arg10[%c0_20, %c0_21] : memref<8x1xf32, #tpu.memory_space<vmem>>, vector<8x1xf32>
    %cst_22 = arith.constant 1.000000e+30 : f32
    %29 = vector.broadcast %cst_22 : f32 to vector<8x8xf32>
    %30 = arith.select %20, %29, %15 : vector<8x8xi1>, vector<8x8xf32>
    %cst_23 = arith.constant dense<0x7F800000> : vector<8xf32>
    %31 = vector.multi_reduction <minimumf>, %30, %cst_23 [1] : vector<8x8xf32> to vector<8xf32>
    %32 = vector.shape_cast %31 : vector<8xf32> to vector<8x1xf32>
    %33 = arith.minimumf %28, %32 : vector<8x1xf32>
    %c0_24 = arith.constant 0 : index
    %c0_25 = arith.constant 0 : index
    %34 = vector.load %arg10[%c0_24, %c0_25] : memref<8x1xf32, #tpu.memory_space<vmem>>, vector<8x1xf32>
    tpu.vector_store %arg10[%c0_24, %c0_25], %33 {strides = array<i32>} : memref<8x1xf32, #tpu.memory_space<vmem>>, vector<8x1xf32>,
    %c0_i32_26 = arith.constant 0 : i32
    %35 = arith.cmpi eq, %arg1, %c0_i32_26 : i32
    %36 = arith.extui %35 : i1 to i32
    %c0_i32_27 = arith.constant 0 : i32
    %37 = arith.cmpi ne, %36, %c0_i32_27 : i32
    scf.if %37 {
      %c0_28 = arith.constant 0 : index
      %c0_29 = arith.constant 0 : index
      %38 = vector.load %arg9[%c0_28, %c0_29] : memref<8x1xf32, #tpu.memory_space<vmem>>, vector<8x1xf32>
      %39 = math.sqrt %38 : vector<8x1xf32>
      %c0_30 = arith.constant 0 : index
      %c0_31 = arith.constant 0 : index
      %40 = vector.load %arg10[%c0_30, %c0_31] : memref<8x1xf32, #tpu.memory_space<vmem>>, vector<8x1xf32>
      %41 = math.sqrt %40 : vector<8x1xf32>
      %42 = arith.subf %39, %41 : vector<8x1xf32>
      %cst_32 = arith.constant 0.000000e+00 : f32
      %43 = vector.broadcast %cst_32 : f32 to vector<8x1xf32>
      %44 = arith.maximumf %42, %43 : vector<8x1xf32>
      %45 = math.absf %42 : vector<8x1xf32>
      %cst_33 = arith.constant 0.000000e+00 : f32
      %46 = vector.broadcast %cst_33 : f32 to vector<8x1xf32>
      %47 = arith.subf %46, %45 : vector<8x1xf32>
      %48 = math.exp %47 : vector<8x1xf32>
      %49 = math.log1p %48 : vector<8x1xf32>
      %50 = arith.addf %44, %49 : vector<8x1xf32>
      %c0_34 = arith.constant 0 : index
      %c0_35 = arith.constant 0 : index
      %51 = vector.load %arg8[%c0_34, %c0_35] : memref<8x1xf32, #tpu.memory_space<vmem>>, vector<8x1xf32>
      tpu.vector_store %arg8[%c0_34, %c0_35], %50 {strides = array<i32>} : memref<8x1xf32, #tpu.memory_space<vmem>>, vector<8x1xf32>,
    } else {
    }
    return
  }
  func.func @transform_0(%arg0: i32, %arg1: i32) -> (i32, i32) {
    %c0_i32 = arith.constant 0 : i32
    %c0_i32_0 = arith.constant 0 : i32
    return %arg0, %c0_i32 : i32, i32
  }
  func.func @transform_1(%arg0: i32, %arg1: i32) -> (i32, i32) {
    %c0_i32 = arith.constant 0 : i32
    %c0_i32_0 = arith.constant 0 : i32
    return %c0_i32, %arg1 : i32, i32
  }
  func.func @transform_2(%arg0: i32, %arg1: i32) -> (i32, i32) {
    %c0_i32 = arith.constant 0 : i32
    %c0_i32_0 = arith.constant 0 : i32
    return %arg0, %c0_i32 : i32, i32
  }
  func.func @transform_3(%arg0: i32, %arg1: i32) -> (i32, i32) {
    %c0_i32 = arith.constant 0 : i32
    %c0_i32_0 = arith.constant 0 : i32
    return %c0_i32, %arg1 : i32, i32
  }
  func.func @transform_4(%arg0: i32, %arg1: i32) -> (i32, i32) {
    %c0_i32 = arith.constant 0 : i32
    %c0_i32_0 = arith.constant 0 : i32
    return %arg0, %c0_i32 : i32, i32
  }
  func.func @transform_5(%arg0: i32, %arg1: i32) -> (i32, i32) {
    %c0_i32 = arith.constant 0 : i32
    %c0_i32_0 = arith.constant 0 : i32
    return %c0_i32, %arg1 : i32, i32
  }
  func.func @transform_6(%arg0: i32, %arg1: i32) -> (i32, i32) {
    %c0_i32 = arith.constant 0 : i32
    %c0_i32_0 = arith.constant 0 : i32
    return %arg0, %c0_i32 : i32, i32
  }
}

</mosaic_0001>

<llo_original>
// kernel: tpu_custom_call.1
$region0: #{tpu_custom_call.1}
  #allocation0 [shape = 'u32[]', space=smem, size = 0x4, offset = 0x4, fixed_abs, tag = 'smem constant byte address 0x4 - core index']
  #allocation1 [shape = 'u32[144,128]{1,0:T(1,128)}', space=vmem, size = 0x12000, scoped, tag = 'internal scratch']
  #allocation2 [shape = 'f32[8,1]{1,0:T(8,128)}', space=vmem, size = 0x1000, scoped, tag = 'scratch operand']
  #allocation3 [shape = 'f32[8,1]{1,0:T(8,128)}', space=vmem, size = 0x1000, scoped, tag = 'scratch operand']
  %s0 = inlined_call_operand.vmem [shape: f32[8,32], index: 0, kind: input, shape index: {}]
  %s1 = inlined_call_operand.vmem [shape: f32[32,8], index: 1, kind: input, shape index: {}]
  %s2 = inlined_call_operand.vmem [shape: f32[8,1], index: 2, kind: input, shape index: {}]
  %s3 = inlined_call_operand.vmem [shape: f32[1,8], index: 3, kind: input, shape index: {}]
  %s4 = inlined_call_operand.vmem [shape: s32[8,1], index: 4, kind: input, shape index: {}]
  %s5 = inlined_call_operand.vmem [shape: s32[1,8], index: 5, kind: input, shape index: {}]
  %s6 = inlined_call_operand.vmem [shape: f32[8,1], index: 6, kind: output, shape index: {}]
  %s7 = sld [smem:[#allocation0]]
  $region42: #{tpu_custom_call.1} parent=0
    _
  %s9 = ssub.s32 1, %s7
  %s10 = scalar_select 0, %s9, %s7
  // Predicated region
  $region2: #{tpu_custom_call.1} parent=0 // pred_check
    _
  $region3: #{tpu_custom_call.1} parent=0 // pred_check_branch
    %12 = sbr.rel (0) target = $region5
  $region4: #{tpu_custom_call.1} parent=0 // pred_region
    _
  $region5: #{tpu_custom_call.1} parent=0 // pred_fallthru
    _
  // Predicated region
  $region6: #{tpu_custom_call.1} parent=0 // pred_check
    _
  $region7: #{tpu_custom_call.1} parent=0 // pred_check_branch
    %14 = sbr.rel (0) target = $region9
  $region8: #{tpu_custom_call.1} parent=0 // pred_region
    _
  $region9: #{tpu_custom_call.1} parent=0 // pred_fallthru
    _
  // Predicated region
  $region10: #{tpu_custom_call.1} parent=0 // pred_check
    _
  $region11: #{tpu_custom_call.1} parent=0 // pred_check_branch
    %16 = sbr.rel (0) target = $region13
  $region12: #{tpu_custom_call.1} parent=0 // pred_region
    _
  $region13: #{tpu_custom_call.1} parent=0 // pred_fallthru
    _
  // Predicated region
  $region14: #{tpu_custom_call.1} parent=0 // pred_check
    _
  $region15: #{tpu_custom_call.1} parent=0 // pred_check_branch
    %18 = sbr.rel (0) target = $region17
  $region16: #{tpu_custom_call.1} parent=0 // pred_region
    _
  $region17: #{tpu_custom_call.1} parent=0 // pred_fallthru
    _
  // Predicated region
  $region18: #{tpu_custom_call.1} parent=0 // pred_check
    _
  $region19: #{tpu_custom_call.1} parent=0 // pred_check_branch
    %20 = sbr.rel (0) target = $region21
  $region20: #{tpu_custom_call.1} parent=0 // pred_region
    _
  $region21: #{tpu_custom_call.1} parent=0 // pred_fallthru
    _
  // Predicated region
  $region22: #{tpu_custom_call.1} parent=0 // pred_check
    _
  $region23: #{tpu_custom_call.1} parent=0 // pred_check_branch
    %22 = sbr.rel (0) target = $region25
  $region24: #{tpu_custom_call.1} parent=0 // pred_region
    _
  $region25: #{tpu_custom_call.1} parent=0 // pred_fallthru
    _
  %p23 = scmp.eq.s32.totalorder 0, 0
  // Predicated region
  $region26: #{tpu_custom_call.1} parent=0 // pred_check
    %p24 = pneg %p23
  $region27: #{tpu_custom_call.1} parent=0 // pred_check_branch
    %26 = sbr.rel (%p24) target = $region29
  $region28: #{tpu_custom_call.1} parent=0 // pred_region
    %vm27 = vcmask 7168
    %28 = vst.msk [vmem:[#allocation2] sm:$0xff] %vm27, 0.0
    %29 = vst.msk [vmem:[#allocation3] sm:$0xff] %vm27, 1e+30
  $region29: #{tpu_custom_call.1} parent=0 // pred_fallthru
    _
  %v30 = vld [vmem:[%s0] sm:$0xff]
  %v31 = vld [vmem:[%s1] sm:$0xff]
  %v32 = vld [vmem:[%s1 + $0x8] sm:$0xff]
  %v33 = vld [vmem:[%s1 + $0x10] sm:$0xff]
  %v34 = vld [vmem:[%s1 + $0x18] sm:$0xff]
  %vm35 = vcmask 261120
  %v37 = vsel %vm35, %v30, 0
  %39 = vmatprep.subr.mxu0 0.0
  %40 = vmatpush1.msra.mxu0 %v31
  %41 = vmatprep.subr.mxu0 0.0
  %42 = vmatpush1.msra.mxu0 %v32
  %43 = vmatprep.subr.mxu0 0.0
  %44 = vmatpush1.msra.mxu0 %v33
  %45 = vmatprep.subr.mxu0 0.0
  %46 = vmatpush1.msra.mxu0 %v34
  %47 = vmatprep.subr.mxu0 0.0
  %48 = vmatpush1.msra.mxu0 0.0
  %49 = vmatprep.subr.mxu0 0.0
  %50 = vmatpush1.msra.mxu0 0.0
  %51 = vmatprep.subr.mxu0 0.0
  %52 = vmatpush1.msra.mxu0 0.0
  %53 = vmatprep.subr.mxu0 0.0
  %54 = vmatpush1.msra.mxu0 0.0
  %55 = vmatprep.subr.mxu0 0.0
  %56 = vmatpush1.msra.mxu0 0.0
  %57 = vmatprep.subr.mxu0 0.0
  %58 = vmatpush1.msra.mxu0 0.0
  %59 = vmatprep.subr.mxu0 0.0
  %60 = vmatpush1.msra.mxu0 0.0
  %61 = vmatprep.subr.mxu0 0.0
  %62 = vmatpush1.msra.mxu0 0.0
  %63 = vmatprep.subr.mxu0 0.0
  %64 = vmatpush1.msra.mxu0 0.0
  %65 = vmatprep.subr.mxu0 0.0
  %66 = vmatpush1.msra.mxu0 0.0
  %67 = vmatprep.subr.mxu0 0.0
  %68 = vmatpush1.msra.mxu0 0.0
  %69 = vmatprep.subr.mxu0 0.0
  %70 = vmatpush1.msra.mxu0 0.0
  %71 = vmatprep.subr.mxu0 0.0
  %72 = vmatpush1.msra.mxu0 0.0
  %73 = vmatprep.subr.mxu0 0.0
  %74 = vmatpush1.msra.mxu0 0.0
  %75 = vmatprep.subr.mxu0 0.0
  %76 = vmatpush1.msra.mxu0 0.0
  %77 = vmatprep.subr.mxu0 0.0
  %78 = vmatpush1.msra.mxu0 0.0
  %79 = vmatprep.subr.mxu0 0.0
  %80 = vmatpush1.msra.mxu0 0.0
  %81 = vmatprep.subr.mxu0 0.0
  %82 = vmatpush1.msra.mxu0 0.0
  %83 = vmatprep.subr.mxu0 0.0
  %84 = vmatpush1.msra.mxu0 0.0
  %85 = vmatprep.subr.mxu0 0.0
  %86 = vmatpush1.msra.mxu0 0.0
  %87 = vmatprep.subr.mxu0 0.0
  %88 = vmatpush1.msra.mxu0 0.0
  %89 = vmatprep.subr.mxu0 0.0
  %90 = vmatpush1.msra.mxu0 0.0
  %91 = vmatprep.subr.mxu0 0.0
  %92 = vmatpush1.msra.mxu0 0.0
  %93 = vmatprep.subr.mxu0 0.0
  %94 = vmatpush1.msra.mxu0 0.0
  %95 = vmatprep.subr.mxu0 0.0
  %96 = vmatpush1.msra.mxu0 0.0
  %97 = vmatprep.subr.mxu0 0.0
  %98 = vmatpush1.msra.mxu0 0.0
  %99 = vmatprep.subr.mxu0 0.0
  %100 = vmatpush1.msra.mxu0 0.0
  %101 = vmatprep.subr.mxu0 0.0
  %102 = vmatpush1.msra.mxu0 0.0
  %103 = vmatprep.mubr.f32.mxu0 0.0
  %104 = vmatmul.mubr.f32.gmra.mrb[0].mxu0 %v37
  %v105 = vpop.f32.mrb[0].mxu0
  %v106 = vadd.f32 0.0, %v105
  %v107 = vpop.f32.mrb[0].mxu0
  %108 = vdwg.mxu0
  %v109 = vld [vmem:[%s3] sm:$0x1]
  %v110 = vmul.f32 %v106, 2.0
  %v112 = vlaneseq
  %v113 = vshrl.u32 %v112, 7
  %v114 = vsub.s32 0, %v113
  %v115 = vrot.slane %v109, %v114
  %v117 = vsub.f32 %v115, %v110
  %v118 = vld [vmem:[%s2] sm:$0xff]
  %120 = vset.pattern.permute.xlu0 0
  %121 = vperm.xlu0 %120, %v118
  %v122 = vpop.permute.xlu0 %121
  %v124 = vadd.f32 %v117, %v122
  %v125 = vmax.f32 %v124, 0.0
  %v126 = vld [vmem:[%s4] sm:$0xff]
  %v127 = vld [vmem:[%s5] sm:$0x1]
  %128 = vset.pattern.permute.xlu0 0
  %129 = vperm.xlu0 %128, %v126
  %v130 = vpop.permute.xlu0 %129
  %v131 = vlaneseq
  %v132 = vshrl.u32 %v131, 7
  %v133 = vsub.s32 0, %v132
  %v134 = vrot.slane %v127, %v133
  %vm135 = vcmp.eq.s32.totalorder %v130, %v134
  %v136 = vld [vmem:[#allocation2] sm:$0xff]
  %v137 = vsel %vm135, %v125, 0.0
  %vm138 = vcmask 64512
  %v139 = vsel %vm138, %v137, -inf
  %140 = vmax.xlane.f32.xlu0 %v139
  %v141 = vpop.xlane.xlu0 %140
  %v142 = vmax.f32 %v136, %v141
  %vm143 = vcmask 7168
  %144 = vst.msk [vmem:[#allocation2] sm:$0xff] %vm143, %v142
  %v145 = vld [vmem:[#allocation3] sm:$0xff]
  %v146 = vsel %vm135, 1e+30, %v125
  %v147 = vsel %vm138, %v146, inf
  %148 = vmin.xlane.f32.xlu0 %v147
  %v149 = vpop.xlane.xlu0 %148
  %v150 = vmin.f32 %v145, %v149
  %151 = vst.msk [vmem:[#allocation3] sm:$0xff] %vm143, %v150
  // Predicated region
  $region30: #{tpu_custom_call.1} parent=0 // pred_check
    %p152 = pneg %p23
  $region31: #{tpu_custom_call.1} parent=0 // pred_check_branch
    %154 = sbr.rel (%p152) target = $region33
  $region32: #{tpu_custom_call.1} parent=0 // pred_region
    %v155 = vld [vmem:[#allocation2] sm:$0xff]
    %v156 = vrsqrt.pop %v155
    %v157 = vmul.f32 %v155, %v156
    %vm158 = vcmp.eq.f32.partialorder %v155, inf
    %v159 = vsel %vm158, %v155, %v157
    %vm160 = vcmp.eq.f32.partialorder %v155, 0.0
    %v161 = vand.u32 %v155, 2147483648
    %v162 = vsel %vm160, %v161, %v159
    %v163 = vld [vmem:[#allocation3] sm:$0xff]
    %v164 = vrsqrt.pop %v163
    %v165 = vmul.f32 %v163, %v164
    %vm166 = vcmp.eq.f32.partialorder %v163, inf
    %v167 = vsel %vm166, %v163, %v165
    %vm168 = vcmp.eq.f32.partialorder %v163, 0.0
    %v169 = vand.u32 %v163, 2147483648
    %v170 = vsel %vm168, %v169, %v167
    %v171 = vsub.f32 %v162, %v170
    %v172 = vmax.f32 %v171, 0.0
    %v173 = vand.u32 2147483647, %v171
    %v174 = vsub.f32 0.0, %v173
    %v175 = vmul.f32 %v174, 1.442695
    %v176 = vpow.pop %v175
    %v177 = vadd.f32 %v176, 1.0
    %v178 = vlog2.pop %v177
    %v179 = vmul.f32 %v178, 0.6931472
    %v180 = vmul.f32 -0.5, %v176
    %v181 = vadd.f32 %v180, 1.0
    %v182 = vmul.f32 %v181, %v176
    %v183 = vand.u32 2147483647, %v176
    %vm184 = vcmp.lt.f32.partialorder %v183, 0.0004427343
    %v185 = vsel %vm184, %v182, %v179
    %v186 = vadd.f32 %v172, %v185
    %187 = vst.msk [vmem:[%s6] sm:$0xff] %vm143, %v186
  $region33: #{tpu_custom_call.1} parent=0 // pred_fallthru
    _
  // Predicated region
  $region34: #{tpu_custom_call.1} parent=0 // pred_check
    _
  $region35: #{tpu_custom_call.1} parent=0 // pred_check_branch
    %189 = sbr.rel (0) target = $region37
  $region36: #{tpu_custom_call.1} parent=0 // pred_region
    _
  $region37: #{tpu_custom_call.1} parent=0 // pred_fallthru
    _
  // Predicated region
  $region38: #{tpu_custom_call.1} parent=0 // pred_check
    _
  $region39: #{tpu_custom_call.1} parent=0 // pred_check_branch
    %191 = sbr.rel (0) target = $region41
  $region40: #{tpu_custom_call.1} parent=0 // pred_region
    _
  $region41: #{tpu_custom_call.1} parent=0 // pred_fallthru
    _

</llo_original>
